<compile_context>
chip_gen: v7x
topology: tpu7x:2x2x1
jax: 0.10.0
libtpu: 0.0.40
codegen_flags: <defaults>
</compile_context>

<pallas_src>
import functools

import jax
import jax.numpy as jnp
from jax.experimental import pallas as pl
from jax.experimental.pallas import tpu as pltpu


def _cb_weights(samples_per_cls, beta):
    """Class-balanced weights, mirrors the PyTorch _cb_weights helper (f32)."""
    spc = samples_per_cls.astype(jnp.float32)
    effective_n = 1.0 - jnp.power(jnp.float32(beta), spc)
    weights = (1.0 - beta) / (effective_n + 1e-08)
    return weights / jnp.sum(weights) * samples_per_cls.shape[0]


def _vmem_capacity_bytes():
    """Physical VMEM of the current chip (128 MiB v5e/v6e, 64 MiB/TC v7x)."""
    try:
        info = pltpu.get_tpu_info()
        cap = getattr(info, "vmem_capacity_bytes", None)
        if cap:
            return int(cap)
    except Exception:
        pass
    return 128 * 2 ** 20


def _num_tensorcores_per_chip():
    """2 only on v7x-class chips; v5e / v6e are single-TensorCore."""
    try:
        kind = jax.devices()[0].device_kind.lower()
        if "v7" in kind or "tpu7" in kind:
            return 2
    except Exception:
        pass
    return 1


def _choose_tile_n(n, c, itemsize, vmem_ceiling):
    """Row tile sized so double-buffered inputs + in-kernel f32 temporaries fit
    comfortably, capped at 512 rows / ~4 MiB of logits per buffer (measured to reach
    ~85% of HBM roofline already); multiple of 16 for packed-sublane alignment."""
    c = max(int(c), 1)
    # Per-row VMEM cost: 2x double-buffered logits + narrow targets/w_t tiles
    # + ~4 full-width (TN, C) f32 temporaries the kernel body materializes.
    per_row = 2 * c * itemsize + 2 * 2 * (4 + 4) + 4 * c * 4
    tile = int(0.6 * vmem_ceiling) // per_row
    tile = min(tile, 512)
    tile = min(tile, (4 * 2 ** 20) // (c * itemsize))   # <= 4 MiB logits / buffer
    tile = int(max(16, tile))
    tile -= tile % 16
    if tile >= n:
        return int(n)      # single block == full dim (always layout-legal)
    return tile


def _cbfocal_kernel(logits_ref, targets_ref, wt_ref, out_ref, acc_ref, *,
                    gamma, n_rows, tile_n, tiles_per_split):
    s = pl.program_id(0)        # core-split index (size 1 on single-TC chips)
    i = pl.program_id(1)        # row-tile index within the split ("arbitrary")
    n_i = pl.num_programs(1)

    @pl.when(i == 0)
    def _init():
        acc_ref[...] = jnp.zeros_like(acc_ref)

    logits = logits_ref[...].astype(jnp.float32)     # (TN, C)
    targets = targets_ref[...]                        # (TN, 1) int32
    w_t = wt_ref[...]                                 # (TN, 1) f32 (pre-gathered)
    tn, c = logits.shape

    # Row-validity mask for the ragged last tile / phantom tiles, built from the
    # *unclamped* tile index.  No full-tile masking of logits is needed: every op
    # below is row-independent, so garbage in padded rows never leaks across rows
    # and is zeroed by the final select on `focal`.
    tile_idx = s * tiles_per_split + i
    row_in_tile = jax.lax.broadcasted_iota(jnp.int32, (tn, 1), 0)
    row_valid = (tile_idx * tile_n + row_in_tile) < n_rows     # (TN, 1) bool

    class_ids = jax.lax.broadcasted_iota(jnp.int32, (tn, c), 1)
    onehot = class_ids == targets                              # (TN, C)

    # Numerically stable log-softmax denominator.
    m = jnp.max(logits, axis=-1, keepdims=True)
    lse = m + jnp.log(jnp.sum(jnp.exp(logits - m), axis=-1, keepdims=True))

    # Target logit via masked sum (implicit broadcast, no materialized broadcast_to).
    logit_t = jnp.sum(jnp.where(onehot, logits, 0.0), axis=-1, keepdims=True)

    # Weighted cross entropy per row, then focal modulation.
    ce = w_t * (lse - logit_t)                                 # (TN, 1)
    pt = jnp.exp(-ce)
    one_minus_pt = 1.0 - pt
    g = float(gamma)
    if g == 2.0:                                               # fast path, no pow
        mod = one_minus_pt * one_minus_pt
    elif g == 1.0:
        mod = one_minus_pt
    elif g == 0.0:
        mod = jnp.ones_like(one_minus_pt)
    elif g == float(int(g)) and g > 0:
        mod = one_minus_pt
        for _ in range(int(g) - 1):
            mod = mod * one_minus_pt
    else:
        mod = one_minus_pt ** g
    focal = jnp.where(row_valid, mod * ce, 0.0)                # (TN, 1)

    acc_ref[...] += jnp.sum(focal, axis=0, keepdims=True)      # running (1, 1) sum

    @pl.when(i == n_i - 1)
    def _finalize():
        # Single lane-dense 128-wide write of this split's partial sum.
        out_ref[...] = jnp.broadcast_to(acc_ref[...], out_ref.shape)


def _split_semantics_candidates(num_splits):
    if num_splits <= 1:
        return [pltpu.ARBITRARY]
    cands = []
    core_par = getattr(pltpu, "CORE_PARALLEL", None)
    if core_par is not None:
        cands.append(core_par)        # real 2-TC sharding on v7x
    cands.append(pltpu.PARALLEL)      # fallback if CORE_PARALLEL is rejected
    return cands


def cb_focal_loss(logits, targets, samples_per_cls, *, beta=0.999, gamma=2.0,
                  reduction="mean", tile_n=None):
    """CBFocal.forward: logits (N, C) float, targets (N,) int."""
    n, c = logits.shape
    w = _cb_weights(samples_per_cls, beta)                     # (C,) f32
    targets_i32 = targets.astype(jnp.int32)
    targets2d = targets_i32.reshape(n, 1)
    # Hoisted class-weight gather (cheap XLA gather on an (N,) vector, f32 precision).
    w_t2d = w[targets_i32].astype(jnp.float32).reshape(n, 1)

    itemsize = jnp.dtype(logits.dtype).itemsize
    vmem_cap = _vmem_capacity_bytes()
    vmem_ceiling = int(0.8 * vmem_cap)                         # 64 MiB-aware on v7x
    if tile_n is None:
        tile_n = _choose_tile_n(n, c, itemsize, vmem_ceiling)

    num_tiles = pl.cdiv(n, tile_n)
    cores = _num_tensorcores_per_chip()
    num_splits = 2 if (cores > 1 and num_tiles >= 2) else 1
    tiles_per_split = pl.cdiv(num_tiles, num_splits)
    max_tile = num_tiles - 1

    if num_splits == 1:
        def row_block(s, i):
            return (i, 0)
    else:
        def row_block(s, i):
            # Phantom tiles (odd tile count) re-read the last real block; their rows
            # are masked inside the kernel, so correctness is unaffected.
            t = s * tiles_per_split + i
            return (jnp.minimum(t, max_tile), 0)

    kernel = functools.partial(
        _cbfocal_kernel, gamma=float(gamma), n_rows=n, tile_n=tile_n,
        tiles_per_split=tiles_per_split)

    # VMEM budget: double-buffered inputs + the (TN, C) f32 temporaries the body
    # materializes, capped at ~80% of physical VMEM for this chip generation.
    vmem_need = (2 * tile_n * c * itemsize          # logits, double-buffered
                 + 2 * 2 * tile_n * (4 + 4)         # targets + w_t, double-buffered
                 + 4 * tile_n * c * 4               # in-kernel (TN, C) f32 temporaries
                 + (1 << 20))                       # narrow vectors, acc, headroom
    vmem_limit = int(min(vmem_ceiling, max(32 * 2 ** 20, vmem_need)))

    candidates = _split_semantics_candidates(num_splits)
    partials = None
    last_err = None
    for split_sem in candidates:
        try:
            out = pl.pallas_call(
                kernel,
                out_shape=jax.ShapeDtypeStruct((1, 128 * num_splits), jnp.float32),
                grid=(num_splits, tiles_per_split),
                in_specs=[
                    pl.BlockSpec((tile_n, c), row_block),
                    pl.BlockSpec((tile_n, 1), row_block),
                    pl.BlockSpec((tile_n, 1), row_block),
                ],
                out_specs=pl.BlockSpec((1, 128), lambda s, i: (0, s)),
                scratch_shapes=[pltpu.VMEM((1, 1), jnp.float32)],
                compiler_params=pltpu.CompilerParams(
                    dimension_semantics=(split_sem, pltpu.ARBITRARY),
                    vmem_limit_bytes=vmem_limit),
            )(logits, targets2d, w_t2d)
            if len(candidates) > 1:
                out = jax.block_until_ready(out)    # force fallback on lowering errors
            partials = out
            break
        except Exception as e:   # noqa: BLE001 - fall back to the next semantics
            last_err = e
            partials = None
    if partials is None:
        raise last_err

    total = jnp.sum(partials.reshape(num_splits, 128)[:, 0])
    if reduction == "mean":
        return total / jnp.float32(n)               # divide by true N, not padded rows
    return total


def _cb_focal_ref(logits, targets, samples_per_cls, *, beta=0.999, gamma=2.0,
                  reduction="mean"):
    """Pure-JAX reference mirroring the PyTorch semantics."""
    w = _cb_weights(samples_per_cls, beta).astype(logits.dtype)
    logp = jax.nn.log_softmax(logits.astype(jnp.float32), axis=-1)
    ce = -w[targets].astype(jnp.float32) * jnp.take_along_axis(
        logp, targets[:, None], axis=-1)[:, 0]
    pt = jnp.exp(-ce)
    focal = (1.0 - pt) ** gamma * ce
    return jnp.mean(focal) if reduction == "mean" else jnp.sum(focal)


if __name__ == "__main__":
    # Case 1: small single-tile problem (module-scale shapes).
    k1, k2, k3 = jax.random.split(jax.random.PRNGKey(0), 3)
    N, C = 8, 32
    logits = jax.random.normal(k1, (N, C), dtype=jnp.float32)
    targets = jax.random.randint(k2, (N,), 0, C, dtype=jnp.int32)
    samples_per_cls = jax.random.randint(k3, (C,), 1, 1000, dtype=jnp.int32)

    loss = cb_focal_loss(logits, targets, samples_per_cls,
                         beta=0.999, gamma=2.0, reduction="mean")
    loss = jax.block_until_ready(loss)
    ref = _cb_focal_ref(logits, targets, samples_per_cls,
                        beta=0.999, gamma=2.0, reduction="mean")
    assert jnp.allclose(loss, ref, rtol=1e-5, atol=1e-5), (loss, ref)

    # Case 2: exercises row tiling, a ragged (padded) final tile, and (on 2-TC chips)
    # the core-split + accumulator path (tile_n forced small for the test).
    k4, k5, k6 = jax.random.split(jax.random.PRNGKey(1), 3)
    N2, C2 = 100, 40
    logits2 = jax.random.normal(k4, (N2, C2), dtype=jnp.float32)
    targets2 = jax.random.randint(k5, (N2,), 0, C2, dtype=jnp.int32)
    spc2 = jax.random.randint(k6, (C2,), 1, 500, dtype=jnp.int32)

    loss2 = cb_focal_loss(logits2, targets2, spc2, beta=0.999, gamma=2.0,
                          reduction="sum", tile_n=16)
    loss2 = jax.block_until_ready(loss2)
    ref2 = _cb_focal_ref(logits2, targets2, spc2, beta=0.999, gamma=2.0,
                         reduction="sum")
    assert jnp.allclose(loss2, ref2, rtol=1e-4, atol=1e-4), (loss2, ref2)

    print("KERNEL_OK")
</pallas_src>

<mosaic_0001>
module attributes {stable_mosaic.version = 11 : i64} {
  func.func @_cbfocal_kernel(%arg0: i32, %arg1: i32, %arg2: memref<8x32xf32, #tpu.memory_space<vmem>>, %arg3: memref<8x1xi32, #tpu.memory_space<vmem>>, %arg4: memref<8x1xf32, #tpu.memory_space<vmem>>, %arg5: memref<1x128xf32, #tpu.memory_space<vmem>>, %arg6: memref<1x1xf32, #tpu.memory_space<vmem>>) attributes {dimension_semantics = [#tpu.dimension_semantics<arbitrary>, #tpu.dimension_semantics<arbitrary>], iteration_bounds = array<i64: 1, 1>, scalar_prefetch = 0 : i64, scratch_operands = 1 : i64, tpu.core_type = #tpu.core_type<tc>, window_params = [{transform_indices = @transform_0, window_bounds = array<i64: 8, 32>}, {transform_indices = @transform_1, window_bounds = array<i64: 8, 1>}, {transform_indices = @transform_2, window_bounds = array<i64: 8, 1>}, {transform_indices = @transform_3, window_bounds = array<i64: 1, 128>}]} {
    %c0_i32 = arith.constant 0 : i32
    %0 = arith.cmpi eq, %arg1, %c0_i32 : i32
    %1 = arith.extui %0 : i1 to i32
    %c0_i32_0 = arith.constant 0 : i32
    %2 = arith.cmpi ne, %1, %c0_i32_0 : i32
    scf.if %2 {
      %cst_20 = arith.constant 0.000000e+00 : f32
      %49 = vector.broadcast %cst_20 : f32 to vector<1x1xf32>
      %c0_21 = arith.constant 0 : index
      %c0_22 = arith.constant 0 : index
      %50 = vector.load %arg6[%c0_21, %c0_22] : memref<1x1xf32, #tpu.memory_space<vmem>>, vector<1x1xf32>
      tpu.vector_store %arg6[%c0_21, %c0_22], %49 {strides = array<i32>} : memref<1x1xf32, #tpu.memory_space<vmem>>, vector<1x1xf32>,
    } else {
    }
    %c0 = arith.constant 0 : index
    %c0_1 = arith.constant 0 : index
    %3 = vector.load %arg2[%c0, %c0_1] : memref<8x32xf32, #tpu.memory_space<vmem>>, vector<8x32xf32>
    %c0_2 = arith.constant 0 : index
    %c0_3 = arith.constant 0 : index
    %4 = vector.load %arg3[%c0_2, %c0_3] : memref<8x1xi32, #tpu.memory_space<vmem>>, vector<8x1xi32>
    %c0_4 = arith.constant 0 : index
    %c0_5 = arith.constant 0 : index
    %5 = vector.load %arg4[%c0_4, %c0_5] : memref<8x1xf32, #tpu.memory_space<vmem>>, vector<8x1xf32>
    %c1_i32 = arith.constant 1 : i32
    %6 = arith.muli %arg0, %c1_i32 : i32
    %7 = arith.addi %6, %arg1 : i32
    %8 = tpu.iota {dimensions = array<i32: 0>} : vector<8x1xi32>
    %c8_i32 = arith.constant 8 : i32
    %9 = arith.muli %7, %c8_i32 : i32
    %10 = vector.broadcast %9 : i32 to vector<8x1xi32>
    %11 = arith.addi %10, %8 : vector<8x1xi32>
    %c8_i32_6 = arith.constant 8 : i32
    %12 = vector.broadcast %c8_i32_6 : i32 to vector<8x1xi32>
    %13 = arith.cmpi slt, %11, %12 : vector<8x1xi32>
    %14 = tpu.iota {dimensions = array<i32: 1>} : vector<8x32xi32>
    %15 = vector.broadcast %4 : vector<8x1xi32> to vector<8x32xi32>
    %16 = arith.cmpi eq, %14, %15 : vector<8x32xi32>
    %cst = arith.constant dense<0xFF800000> : vector<8xf32>
    %17 = vector.multi_reduction <maximumf>, %3, %cst [1] : vector<8x32xf32> to vector<8xf32>
    %18 = vector.shape_cast %17 : vector<8xf32> to vector<8x1xf32>
    %19 = vector.broadcast %18 : vector<8x1xf32> to vector<8x32xf32>
    %20 = arith.subf %3, %19 : vector<8x32xf32>
    %21 = math.exp %20 : vector<8x32xf32>
    %cst_7 = arith.constant dense<0.000000e+00> : vector<8xf32>
    %22 = vector.multi_reduction <add>, %21, %cst_7 [1] : vector<8x32xf32> to vector<8xf32>
    %23 = vector.shape_cast %22 : vector<8xf32> to vector<8x1xf32>
    %24 = math.log %23 : vector<8x1xf32>
    %25 = arith.addf %18, %24 : vector<8x1xf32>
    %cst_8 = arith.constant 0.000000e+00 : f32
    %26 = vector.broadcast %cst_8 : f32 to vector<8x32xf32>
    %27 = arith.select %16, %3, %26 : vector<8x32xi1>, vector<8x32xf32>
    %cst_9 = arith.constant dense<0.000000e+00> : vector<8xf32>
    %28 = vector.multi_reduction <add>, %27, %cst_9 [1] : vector<8x32xf32> to vector<8xf32>
    %29 = vector.shape_cast %28 : vector<8xf32> to vector<8x1xf32>
    %30 = arith.subf %25, %29 : vector<8x1xf32>
    %31 = arith.mulf %5, %30 : vector<8x1xf32>
    %cst_10 = arith.constant 0.000000e+00 : f32
    %32 = vector.broadcast %cst_10 : f32 to vector<8x1xf32>
    %33 = arith.subf %32, %31 : vector<8x1xf32>
    %34 = math.exp %33 : vector<8x1xf32>
    %cst_11 = arith.constant 1.000000e+00 : f32
    %35 = vector.broadcast %cst_11 : f32 to vector<8x1xf32>
    %36 = arith.subf %35, %34 : vector<8x1xf32>
    %37 = arith.mulf %36, %36 : vector<8x1xf32>
    %38 = arith.mulf %37, %31 : vector<8x1xf32>
    %cst_12 = arith.constant 0.000000e+00 : f32
    %39 = vector.broadcast %cst_12 : f32 to vector<8x1xf32>
    %40 = arith.select %13, %38, %39 : vector<8x1xi1>, vector<8x1xf32>
    %c0_13 = arith.constant 0 : index
    %c0_14 = arith.constant 0 : index
    %41 = vector.load %arg6[%c0_13, %c0_14] : memref<1x1xf32, #tpu.memory_space<vmem>>, vector<1x1xf32>
    %cst_15 = arith.constant dense<0.000000e+00> : vector<1xf32>
    %42 = vector.multi_reduction <add>, %40, %cst_15 [0] : vector<8x1xf32> to vector<1xf32>
    %43 = vector.shape_cast %42 : vector<1xf32> to vector<1x1xf32>
    %44 = arith.addf %41, %43 : vector<1x1xf32>
    %c0_16 = arith.constant 0 : index
    %c0_17 = arith.constant 0 : index
    %45 = vector.load %arg6[%c0_16, %c0_17] : memref<1x1xf32, #tpu.memory_space<vmem>>, vector<1x1xf32>
    tpu.vector_store %arg6[%c0_16, %c0_17], %44 {strides = array<i32>} : memref<1x1xf32, #tpu.memory_space<vmem>>, vector<1x1xf32>,
    %c0_i32_18 = arith.constant 0 : i32
    %46 = arith.cmpi eq, %arg1, %c0_i32_18 : i32
    %47 = arith.extui %46 : i1 to i32
    %c0_i32_19 = arith.constant 0 : i32
    %48 = arith.cmpi ne, %47, %c0_i32_19 : i32
    scf.if %48 {
      %c0_20 = arith.constant 0 : index
      %c0_21 = arith.constant 0 : index
      %49 = vector.load %arg6[%c0_20, %c0_21] : memref<1x1xf32, #tpu.memory_space<vmem>>, vector<1x1xf32>
      %50 = vector.shape_cast %49 : vector<1x1xf32> to vector<1x1xf32>
      %51 = vector.broadcast %50 : vector<1x1xf32> to vector<1x128xf32>
      %c0_22 = arith.constant 0 : index
      %c0_23 = arith.constant 0 : index
      %52 = vector.load %arg5[%c0_22, %c0_23] : memref<1x128xf32, #tpu.memory_space<vmem>>, vector<1x128xf32>
      tpu.vector_store %arg5[%c0_22, %c0_23], %51 {strides = array<i32>} : memref<1x128xf32, #tpu.memory_space<vmem>>, vector<1x128xf32>,
    } else {
    }
    return
  }
  func.func @transform_0(%arg0: i32, %arg1: i32) -> (i32, i32) {
    %c0_i32 = arith.constant 0 : i32
    %c0_i32_0 = arith.constant 0 : i32
    return %arg1, %c0_i32 : i32, i32
  }
  func.func @transform_1(%arg0: i32, %arg1: i32) -> (i32, i32) {
    %c0_i32 = arith.constant 0 : i32
    %c0_i32_0 = arith.constant 0 : i32
    return %arg1, %c0_i32 : i32, i32
  }
  func.func @transform_2(%arg0: i32, %arg1: i32) -> (i32, i32) {
    %c0_i32 = arith.constant 0 : i32
    %c0_i32_0 = arith.constant 0 : i32
    return %arg1, %c0_i32 : i32, i32
  }
  func.func @transform_3(%arg0: i32, %arg1: i32) -> (i32, i32) {
    %c0_i32 = arith.constant 0 : i32
    %c0_i32_0 = arith.constant 0 : i32
    return %c0_i32, %arg0 : i32, i32
  }
}

</mosaic_0001>

<llo_original>
// kernel: tpu_custom_call.1
$region0: #{tpu_custom_call.1}
  #allocation0 [shape = 'u32[]', space=smem, size = 0x4, offset = 0x4, fixed_abs, tag = 'smem constant byte address 0x4 - core index']
  #allocation1 [shape = 'u32[144,128]{1,0:T(1,128)}', space=vmem, size = 0x12000, scoped, tag = 'internal scratch']
  #allocation2 [shape = 'f32[1,1]{1,0:T(1,128)}', space=vmem, size = 0x200, scoped, tag = 'scratch operand']
  %s0 = inlined_call_operand.vmem [shape: f32[8,32], index: 0, kind: input, shape index: {}]
  %s1 = inlined_call_operand.vmem [shape: s32[8,1], index: 1, kind: input, shape index: {}]
  %s2 = inlined_call_operand.vmem [shape: f32[8,1], index: 2, kind: input, shape index: {}]
  %s3 = inlined_call_operand.hbm [shape: f32[1,128], index: 3, kind: output, shape index: {}]
  %s4 = sld [smem:[#allocation0]]
  $region30: #{tpu_custom_call.1} parent=0
    _
  %s6 = ssub.s32 1, %s4
  %s7 = scalar_select 0, %s6, %s4
  $region1: #{tpu_custom_call.1} parent=0
    #allocation3 [shape = 'u8[512]{0}', space=vmem, size = 0x400, scoped, tag = 'output window, operand 0, single buffered']
    #allocation4 [shape = 's32[1]{0}', space=sflag, size = 0x4, scoped, tag = 'scoped memory for tpu_custom_call.1']
    %8 = vsyncpa [#allocation4], 0
    // Predicated region
    $region2: #{tpu_custom_call.1} parent=1 // pred_check
      _
    $region3: #{tpu_custom_call.1} parent=1 // pred_check_branch
      %10 = sbr.rel (0) target = $region5
    $region4: #{tpu_custom_call.1} parent=1 // pred_region
      _
    $region5: #{tpu_custom_call.1} parent=1 // pred_fallthru
      _
    // Predicated region
    $region6: #{tpu_custom_call.1} parent=1 // pred_check
      _
    $region7: #{tpu_custom_call.1} parent=1 // pred_check_branch
      %12 = sbr.rel (0) target = $region9
    $region8: #{tpu_custom_call.1} parent=1 // pred_region
      _
    $region9: #{tpu_custom_call.1} parent=1 // pred_fallthru
      _
    // Predicated region
    $region10: #{tpu_custom_call.1} parent=1 // pred_check
      _
    $region11: #{tpu_custom_call.1} parent=1 // pred_check_branch
      %14 = sbr.rel (0) target = $region13
    $region12: #{tpu_custom_call.1} parent=1 // pred_region
      _
    $region13: #{tpu_custom_call.1} parent=1 // pred_fallthru
      _
    %p15 = scmp.eq.s32.totalorder 0, 0
    // Predicated region
    $region14: #{tpu_custom_call.1} parent=1 // pred_check
      %p16 = pneg %p15
    $region15: #{tpu_custom_call.1} parent=1 // pred_check_branch
      %18 = sbr.rel (%p16) target = $region17
    $region16: #{tpu_custom_call.1} parent=1 // pred_region
      %vm19 = vcmask 0
      %20 = vst.msk [vmem:[#allocation2] sm:$0x1] %vm19, 0.0
    $region17: #{tpu_custom_call.1} parent=1 // pred_fallthru
      _
    %v21 = vld [vmem:[%s0] sm:$0xff]
    %v22 = vld [vmem:[%s1] sm:$0xff]
    %v23 = vld [vmem:[%s2] sm:$0xff]
    %s24 = sadd.s32 0, 0
    %v25 = vlaneseq
    %v26 = vshrl.u32 %v25, 7
    %s27 = smul.u32 %s24, 8
    %v28 = vstv %s27
    %v29 = vadd.s32 %v28, %v26
    %vm30 = vcmp.lt.s32.totalorder %v29, 8
    %v31 = vlaneseq
    %v32 = vand.u32 %v31, 127
    %33 = vset.pattern.permute.xlu0 0
    %34 = vperm.xlu0 %33, %v22
    %v35 = vpop.permute.xlu0 %34
    %vm36 = vcmp.eq.s32.totalorder %v32, %v35
    %vm37 = vcmask 261120
    %v38 = vsel %vm37, %v21, -inf
    %39 = vmax.xlane.f32.xlu0 %v38
    %v40 = vpop.xlane.xlu0 %39
    %v41 = vsub.f32 %v21, %v40
    %v42 = vmul.f32 %v41, 1.442695
    %v43 = vpow.pop %v42
    %v44 = vsel %vm37, %v43, 0.0
    %45 = vadd.xlane.f32.xlu0 %v44
    %v46 = vpop.xlane.xlu0 %45
    %v47 = vlog2.pop %v46
    %v48 = vmul.f32 %v47, 0.6931472
    %v49 = vadd.f32 %v40, %v48
    %v50 = vsel %vm36, %v21, 0.0
    %v51 = vsel %vm37, %v50, 0.0
    %52 = vadd.xlane.f32.xlu0 %v51
    %v53 = vpop.xlane.xlu0 %52
    %v54 = vsub.f32 %v49, %v53
    %v55 = vmul.f32 %v23, %v54
    %v56 = vsub.f32 0.0, %v55
    %v57 = vmul.f32 %v56, 1.442695
    %v58 = vpow.pop %v57
    %v59 = vsub.f32 1.0, %v58
    %v60 = vmul.f32 %v59, %v59
    %v61 = vmul.f32 %v60, %v55
    %v62 = vsel %vm30, %v61, 0.0
    %v63 = vld [vmem:[#allocation2] sm:$0x1]
    %vm64 = vcmask 7168
    %v65 = vsel %vm64, %v62, 0.0
    %v66 = vrot.slane %v65, 4
    %v67 = vadd.f32 %v65, %v66
    %v68 = vrot.slane %v67, 2
    %v69 = vadd.f32 %v67, %v68
    %v70 = vrot.slane %v69, 1
    %v71 = vadd.f32 %v69, %v70
    %v72 = vadd.f32 %v63, %v71
    %vm73 = vcmask 0
    %74 = vst.msk [vmem:[#allocation2] sm:$0x1] %vm73, %v72
    // Predicated region
    $region18: #{tpu_custom_call.1} parent=1 // pred_check
      %p75 = pneg %p15
    $region19: #{tpu_custom_call.1} parent=1 // pred_check_branch
      %77 = sbr.rel (%p75) target = $region21
    $region20: #{tpu_custom_call.1} parent=1 // pred_region
      %v78 = vld [vmem:[#allocation2] sm:$0x1]
      %80 = vset.pattern.permute.xlu0 0
      %81 = vperm.xlu0 %80, %v78
      %v82 = vpop.permute.xlu0 %81
      %v84 = vlaneseq
      %v85 = vshrl.u32 %v84, 7
      %v86 = vsub.s32 0, %v85
      %v87 = vrot.slane %v82, %v86
      %88 = vst [vmem:[#allocation3] sm:$0x1] %v87
    $region21: #{tpu_custom_call.1} parent=1 // pred_fallthru
      _
    // Predicated region
    $region22: #{tpu_custom_call.1} parent=1 // pred_check
      _
    $region23: #{tpu_custom_call.1} parent=1 // pred_check_branch
      %90 = sbr.rel (0) target = $region25
    $region24: #{tpu_custom_call.1} parent=1 // pred_region
      %s92 = ssub.s32 16, 16
      %93 = vsyncadd [#allocation4], %s92
      %s95 = sshll.u32 [#allocation3], 4
      %s96 = int_to_ptr.vmem [resolvable:$true] %s95
      %98 = dma.vmem_to_hbm [thread:$0]  %s96, 16, %s3, [#allocation4]
    $region25: #{tpu_custom_call.1} parent=1 // pred_fallthru
      _
    // Predicated region
    $region26: #{tpu_custom_call.1} parent=1 // pred_check
      _
    $region27: #{tpu_custom_call.1} parent=1 // pred_check_branch
      %100 = sbr.rel (0) target = $region29
    $region28: #{tpu_custom_call.1} parent=1 // pred_region
      %101 = dma.done [#allocation4], 16
    $region29: #{tpu_custom_call.1} parent=1 // pred_fallthru
      _
    %102 = vsyncpa [#allocation4], 1

</llo_original>
